<compile_context>
chip_gen: v7x
topology: tpu7x:2x2x1
jax: 0.10.0
libtpu: 0.0.40
codegen_flags: <defaults>
</compile_context>

<pallas_src>
import functools
import math

import jax
import jax.numpy as jnp
import numpy as np
from jax.experimental import pallas as pl
from jax.experimental.pallas import tpu as pltpu

_INV_SQRT_2PI = 1.0 / math.sqrt(2.0 * math.pi)


# --------------------------------- kernel ---------------------------------

def _gauss_mix_kernel(w_ref, x_ref, p_ref, o_ref, *, num_gaussians):
    """One (tn, tl) tile of: sum_k relu(w_k) * N(x; mu_k, softplus(eps_k)).

    p_ref is the packed (tn, 2K) parameter tile: [:, :K] = mu, [:, K:] = eps.
    """
    K = num_gaussians
    x = x_ref[...]                                  # (tn, tl) f32
    mu = p_ref[:, :K]                               # (tn, K)  f32
    eps = p_ref[:, K:]                              # (tn, K)  f32

    # Per-row / per-gaussian preprocessing on the small (tn, K) operand,
    # hoisted out of the wide per-element work.
    # Stable softplus == log(1 + exp(eps)) without overflow for large eps.
    sigma = jnp.maximum(eps, 0.0) + jnp.log(1.0 + jnp.exp(-jnp.abs(eps)))
    inv_sigma = pl.reciprocal(sigma, approx=False)  # exact; tiny operand
    coeff = _INV_SQRT_2PI * inv_sigma               # 1 / (sigma * sqrt(2*pi))
    quad = -0.5 * inv_sigma * inv_sigma             # folds /sigma^2 and -0.5

    # Static unroll: K is small (<= a few).  For large K (> ~8) switch to
    # lax.fori_loop(..., unroll=True) to bound vreg live ranges.
    acc = None
    for k in range(K):
        w_k = jnp.maximum(w_ref[k], 0.0)            # relu(weight), SMEM scalar
        d = x - mu[:, k:k + 1]                      # (tn,1) -> (tn,tl) broadcast
        term = (w_k * coeff[:, k:k + 1]) * jnp.exp(quad[:, k:k + 1] * (d * d))
        acc = term if acc is None else acc + term   # k=0 peeled: no zeros init
    o_ref[...] = acc.astype(o_ref.dtype)


# ------------------------------ tile selection ------------------------------

def _round_up(a, b):
    return (a + b - 1) // b * b


def _default_tile_caps():
    """Per-generation tile caps (f32 bytes/tile ~= tn*tl*4)."""
    try:
        kind = jax.devices()[0].device_kind.lower()
    except Exception:
        kind = ""
    if "v6" in kind or "v7" in kind:
        # ~4 MiB tiles; double-buffered x+out ~16-17 MiB < 32 MiB default
        # scoped VMEM on v6e / v7x (and well under v7x's 64 MiB physical).
        return 512, 2048
    # v5e / older / unknown: ~2 MiB tiles < 16 MiB default scoped VMEM.
    return 512, 1024


def _pick_tile(dim, unit, cap):
    """Tile size: multiple of `unit`, <= cap, preferring one that divides the
    `unit`-aligned extent (per-block padding < unit). Falls back to the cap
    (Pallas masks the edge block) if a dividing tile would be < cap/2."""
    aligned = _round_up(dim, unit)
    cap = max(unit, min(_round_up(cap, unit), aligned))
    t = cap
    while aligned % t != 0:
        t -= unit
    return t if 2 * t >= cap else cap


def _split_for_megacore(tn, tl, N, L):
    """Ensure >= 2 grid blocks along a parallel axis so both v7x TCs get work."""
    l_aligned = _round_up(L, 128)
    n_aligned = _round_up(N, 8)
    if l_aligned >= 2 * 128:
        return tn, max(128, (l_aligned // 2) // 128 * 128)
    if n_aligned >= 2 * 8:
        return max(8, (n_aligned // 2) // 8 * 8), tl
    return tn, tl


# --------------------------------- wrappers ---------------------------------

def gauss_mixture_forward(x, mu, eps, weights, *, tile_n=None, tile_l=None):
    """x: (N, L); mu, eps: (K, N, 1); weights: (K,)  ->  (N, L), float32."""
    N, L = x.shape
    K = mu.shape[0]

    x = x.astype(jnp.float32)
    weights = weights.astype(jnp.float32)
    # Lane-compact packed (N, 2K) parameter layout: one tiny DMA per row tile
    # (a (K, N, 1) block would pad its size-1 lane dim to 128 per gaussian).
    params = jnp.concatenate(
        [jnp.transpose(mu.reshape(K, N)), jnp.transpose(eps.reshape(K, N))],
        axis=1).astype(jnp.float32)                    # (N, 2K)

    cap_n, cap_l = _default_tile_caps()
    if tile_n is not None:
        cap_n = tile_n
    if tile_l is not None:
        cap_l = tile_l
    tn = _pick_tile(N, 8, cap_n)
    tl = _pick_tile(L, 128, cap_l)
    if pl.cdiv(N, tn) * pl.cdiv(L, tl) < 2:
        tn, tl = _split_for_megacore(tn, tl, N, L)
    grid = (pl.cdiv(N, tn), pl.cdiv(L, tl))

    kernel = functools.partial(_gauss_mix_kernel, num_gaussians=K)
    out = pl.pallas_call(
        kernel,
        out_shape=jax.ShapeDtypeStruct((N, L), jnp.float32),
        grid=grid,
        in_specs=[
            pl.BlockSpec(memory_space=pltpu.MemorySpace.SMEM),   # weights (K,)
            pl.BlockSpec((tn, tl), lambda i, j: (i, j)),         # x tile
            pl.BlockSpec((tn, 2 * K), lambda i, j: (i, 0)),      # packed mu|eps
        ],
        out_specs=pl.BlockSpec((tn, tl), lambda i, j: (i, j)),
        compiler_params=pltpu.CompilerParams(
            dimension_semantics=("parallel", "parallel")),
    )(weights, x, params)
    return out


def gauss_forward(x, mu, eps):
    """Exact GaussModel.forward: mu, eps of shape (N, 1)."""
    return gauss_mixture_forward(
        x, mu[None], eps[None], jnp.ones((1,), dtype=jnp.float32))


# ----------------------------- pure-JAX references -----------------------------

def gauss_reference(x, mu, eps):
    sigma = jnp.log(1.0 + jnp.exp(eps))
    return (1.0 / (sigma * np.sqrt(2.0 * np.pi))
            * jnp.exp(-0.5 * ((x - mu) / sigma) ** 2))


def gauss_mixture_reference(x, mu, eps, weights):
    sigma = jnp.log(1.0 + jnp.exp(eps))                          # (K, N, 1)
    w = jnp.maximum(weights, 0.0)[:, None, None]                 # (K, 1, 1)
    pdf = (1.0 / (sigma * np.sqrt(2.0 * np.pi))
           * jnp.exp(-0.5 * ((x[None] - mu) / sigma) ** 2))      # (K, N, L)
    return jnp.sum(w * pdf, axis=0)


if __name__ == "__main__":
    key = jax.random.PRNGKey(0)
    k_x1, k_x2, k_mu2, k_eps2 = jax.random.split(key, 4)

    # --- GaussModel forward (default init: mu = L/2, eps = 1) ---
    N, L = 8, 16
    mu1 = jnp.full((N, 1), L / 2.0, dtype=jnp.float32)
    eps1 = jnp.ones((N, 1), dtype=jnp.float32)
    x1 = jax.random.uniform(k_x1, (N, L), dtype=jnp.float32,
                            minval=0.0, maxval=float(L))
    out1 = jax.block_until_ready(gauss_forward(x1, mu1, eps1))
    ref1 = gauss_reference(x1, mu1, eps1)
    assert out1.shape == (N, L)
    np.testing.assert_allclose(np.asarray(out1), np.asarray(ref1),
                               rtol=1e-4, atol=1e-7)

    # --- relu-weighted sum of GaussModels (exercises masked row edge blocks) ---
    K, N2, L2 = 3, 12, 40
    mu2 = L2 / 2.0 + 2.0 * jax.random.normal(k_mu2, (K, N2, 1), dtype=jnp.float32)
    eps2 = 1.0 + 0.3 * jax.random.normal(k_eps2, (K, N2, 1), dtype=jnp.float32)
    w2 = jnp.full((K,), 1.0 / K, dtype=jnp.float32)
    x2 = jax.random.uniform(k_x2, (N2, L2), dtype=jnp.float32,
                            minval=0.0, maxval=float(L2))
    out2 = jax.block_until_ready(gauss_mixture_forward(x2, mu2, eps2, w2))
    ref2 = gauss_mixture_reference(x2, mu2, eps2, w2)
    assert out2.shape == (N2, L2)
    np.testing.assert_allclose(np.asarray(out2), np.asarray(ref2),
                               rtol=1e-4, atol=1e-7)

    print("KERNEL_OK")
</pallas_src>

<mosaic_0001>
module attributes {stable_mosaic.version = 11 : i64} {
  func.func @_gauss_mix_kernel(%arg0: i32, %arg1: i32, %arg2: memref<1xf32, #tpu.memory_space<smem>>, %arg3: memref<8x128xf32, #tpu.memory_space<vmem>>, %arg4: memref<8x2xf32, #tpu.memory_space<vmem>>, %arg5: memref<8x128xf32, #tpu.memory_space<vmem>>) attributes {dimension_semantics = [#tpu.dimension_semantics<parallel>, #tpu.dimension_semantics<parallel>], iteration_bounds = array<i64: 1, 1>, scalar_prefetch = 0 : i64, scratch_operands = 0 : i64, tpu.core_type = #tpu.core_type<tc>, window_params = [{transform_indices = @transform_0, window_bounds = array<i64: 1>}, {transform_indices = @transform_1, window_bounds = array<i64: 8, 128>}, {transform_indices = @transform_2, window_bounds = array<i64: 8, 2>}, {transform_indices = @transform_3, window_bounds = array<i64: 8, 128>}]} {
    %c0 = arith.constant 0 : index
    %c0_0 = arith.constant 0 : index
    %0 = vector.load %arg3[%c0, %c0_0] : memref<8x128xf32, #tpu.memory_space<vmem>>, vector<8x128xf32>
    %c0_1 = arith.constant 0 : index
    %c0_2 = arith.constant 0 : index
    %1 = vector.load %arg4[%c0_1, %c0_2] : memref<8x2xf32, #tpu.memory_space<vmem>>, vector<8x1xf32>
    %c0_3 = arith.constant 0 : index
    %c1 = arith.constant 1 : index
    %2 = vector.load %arg4[%c0_3, %c1] : memref<8x2xf32, #tpu.memory_space<vmem>>, vector<8x1xf32>
    %cst = arith.constant 0.000000e+00 : f32
    %3 = vector.broadcast %cst : f32 to vector<8x1xf32>
    %4 = arith.maximumf %2, %3 : vector<8x1xf32>
    %5 = math.absf %2 : vector<8x1xf32>
    %cst_4 = arith.constant 0.000000e+00 : f32
    %6 = vector.broadcast %cst_4 : f32 to vector<8x1xf32>
    %7 = arith.subf %6, %5 : vector<8x1xf32>
    %8 = math.exp %7 : vector<8x1xf32>
    %cst_5 = arith.constant 1.000000e+00 : f32
    %9 = vector.broadcast %cst_5 : f32 to vector<8x1xf32>
    %10 = arith.addf %9, %8 : vector<8x1xf32>
    %11 = math.log %10 : vector<8x1xf32>
    %12 = arith.addf %4, %11 : vector<8x1xf32>
    %13 = tpu.reciprocal %12 : vector<8x1xf32> -> vector<8x1xf32>
    %cst_6 = arith.constant 0.398942292 : f32
    %14 = vector.broadcast %cst_6 : f32 to vector<8x1xf32>
    %15 = arith.mulf %14, %13 : vector<8x1xf32>
    %cst_7 = arith.constant -5.000000e-01 : f32
    %16 = vector.broadcast %cst_7 : f32 to vector<8x1xf32>
    %17 = arith.mulf %16, %13 : vector<8x1xf32>
    %18 = arith.mulf %17, %13 : vector<8x1xf32>
    %c0_8 = arith.constant 0 : index
    %19 = memref.load %arg2[%c0_8] : memref<1xf32, #tpu.memory_space<smem>>
    %cst_9 = arith.constant 0.000000e+00 : f32
    %20 = arith.maximumf %19, %cst_9 : f32
    %21 = vector.broadcast %1 : vector<8x1xf32> to vector<8x128xf32>
    %22 = arith.subf %0, %21 : vector<8x128xf32>
    %23 = vector.broadcast %20 : f32 to vector<8x1xf32>
    %24 = arith.mulf %23, %15 : vector<8x1xf32>
    %25 = arith.mulf %22, %22 : vector<8x128xf32>
    %26 = vector.broadcast %18 : vector<8x1xf32> to vector<8x128xf32>
    %27 = arith.mulf %26, %25 : vector<8x128xf32>
    %28 = math.exp %27 : vector<8x128xf32>
    %29 = vector.broadcast %24 : vector<8x1xf32> to vector<8x128xf32>
    %30 = arith.mulf %29, %28 : vector<8x128xf32>
    %c0_10 = arith.constant 0 : index
    %c0_11 = arith.constant 0 : index
    %31 = vector.load %arg5[%c0_10, %c0_11] : memref<8x128xf32, #tpu.memory_space<vmem>>, vector<8x128xf32>
    tpu.vector_store %arg5[%c0_10, %c0_11], %30 {strides = array<i32>} : memref<8x128xf32, #tpu.memory_space<vmem>>, vector<8x128xf32>,
    return
  }
  func.func @transform_0(%arg0: i32, %arg1: i32) -> i32 {
    %c0_i32 = arith.constant 0 : i32
    %c0_i32_0 = arith.constant 0 : i32
    return %c0_i32 : i32
  }
  func.func @transform_1(%arg0: i32, %arg1: i32) -> (i32, i32) {
    %c0_i32 = arith.constant 0 : i32
    return %arg0, %arg1 : i32, i32
  }
  func.func @transform_2(%arg0: i32, %arg1: i32) -> (i32, i32) {
    %c0_i32 = arith.constant 0 : i32
    %c0_i32_0 = arith.constant 0 : i32
    return %arg0, %c0_i32 : i32, i32
  }
  func.func @transform_3(%arg0: i32, %arg1: i32) -> (i32, i32) {
    %c0_i32 = arith.constant 0 : i32
    return %arg0, %arg1 : i32, i32
  }
}

</mosaic_0001>

<llo_original>
// kernel: tpu_custom_call.1
$region0: #{tpu_custom_call.1}
  #allocation0 [shape = 'u32[]', space=smem, size = 0x4, offset = 0x4, fixed_abs, tag = 'smem constant byte address 0x4 - core index']
  #allocation1 [shape = 'u32[144,128]{1,0:T(1,128)}', space=vmem, size = 0x12000, scoped, tag = 'internal scratch']
  #allocation2 [shape = 'f32[1]{0:T(128)S(6)}', space=smem, size = 0x200, scoped, tag = 'scoped memory for tpu_custom_call.1']
  %s0 = inlined_call_operand.<no memory space> [shape: f32[1], index: 0, kind: input, shape index: {}]
  %s1 = inlined_call_operand.vmem [shape: f32[8,16], index: 1, kind: input, shape index: {}]
  %s2 = inlined_call_operand.vmem [shape: f32[8,2], index: 2, kind: input, shape index: {}]
  %s3 = inlined_call_operand.hbm [shape: f32[8,16], index: 3, kind: output, shape index: {}]
  %s4 = sld [smem:[#allocation0]]
  $region22: #{tpu_custom_call.1} parent=0
    _
  %s6 = ssub.s32 1, %s4
  %s7 = scalar_select 0, %s6, %s4
  %8 = sst [smem:[#allocation2]] %s0
  $region1: #{tpu_custom_call.1} parent=0
    #allocation3 [shape = 'u8[4096]{0}', space=vmem, size = 0x1000, scoped, tag = 'output window, operand 0, single buffered']
    #allocation4 [shape = 's32[1]{0}', space=sflag, size = 0x4, scoped, tag = 'scoped memory for tpu_custom_call.1']
    %9 = vsyncpa [#allocation4], 0
    // Predicated region
    $region2: #{tpu_custom_call.1} parent=1 // pred_check
      _
    $region3: #{tpu_custom_call.1} parent=1 // pred_check_branch
      %11 = sbr.rel (0) target = $region5
    $region4: #{tpu_custom_call.1} parent=1 // pred_region
      _
    $region5: #{tpu_custom_call.1} parent=1 // pred_fallthru
      _
    // Predicated region
    $region6: #{tpu_custom_call.1} parent=1 // pred_check
      _
    $region7: #{tpu_custom_call.1} parent=1 // pred_check_branch
      %13 = sbr.rel (0) target = $region9
    $region8: #{tpu_custom_call.1} parent=1 // pred_region
      _
    $region9: #{tpu_custom_call.1} parent=1 // pred_fallthru
      _
    // Predicated region
    $region10: #{tpu_custom_call.1} parent=1 // pred_check
      _
    $region11: #{tpu_custom_call.1} parent=1 // pred_check_branch
      %15 = sbr.rel (0) target = $region13
    $region12: #{tpu_custom_call.1} parent=1 // pred_region
      _
    $region13: #{tpu_custom_call.1} parent=1 // pred_fallthru
      _
    %v16 = vld [vmem:[%s1] sm:$0xff]
    %v17 = vld [vmem:[%s2] sm:$0xff]
    %v18 = vmax.f32 %v17, 0.0
    %v19 = vand.u32 2147483647, %v17
    %v20 = vsub.f32 0.0, %v19
    %v21 = vmul.f32 %v20, 1.442695
    %v22 = vpow.pop %v21
    %v23 = vadd.f32 %v22, 1.0
    %v24 = vlog2.pop %v23
    %v25 = vmul.f32 %v24, 0.6931472
    %v26 = vadd.f32 %v18, %v25
    %v27 = vrcp.pop %v26
    %v28 = vmul.f32 %v27, 0.3989423
    %v29 = vmul.f32 %v27, -0.5
    %v30 = vmul.f32 %v29, %v27
    %s31 = sld [smem:[#allocation2]]
    %s32 = smax.f32 %s31, 0.0
    %34 = vset.pattern.permute.xlu0 0
    %35 = vperm.xlu0 %34, %v17
    %v36 = vpop.permute.xlu0 %35
    %v38 = vsub.f32 %v16, %v36
    %v39 = vstv %s32
    %v40 = vmul.f32 %v39, %v28
    %v41 = vmul.f32 %v38, %v38
    %43 = vset.pattern.permute.xlu0 1
    %44 = vperm.xlu0 %43, %v30
    %v45 = vpop.permute.xlu0 %44
    %v47 = vmul.f32 %v45, %v41
    %v48 = vmul.f32 %v47, 1.442695
    %v49 = vpow.pop %v48
    %51 = vset.pattern.permute.xlu0 1
    %52 = vperm.xlu0 %51, %v40
    %v53 = vpop.permute.xlu0 %52
    %v55 = vmul.f32 %v53, %v49
    %56 = vst [vmem:[#allocation3] sm:$0xff] %v55
    // Predicated region
    $region14: #{tpu_custom_call.1} parent=1 // pred_check
      _
    $region15: #{tpu_custom_call.1} parent=1 // pred_check_branch
      %58 = sbr.rel (0) target = $region17
    $region16: #{tpu_custom_call.1} parent=1 // pred_region
      %s60 = ssub.s32 128, 128
      %61 = vsyncadd [#allocation4], %s60
      %s63 = sshll.u32 [#allocation3], 4
      %s64 = int_to_ptr.vmem [resolvable:$true] %s63
      %66 = dma.vmem_to_hbm [thread:$0]  %s64, 128, %s3, [#allocation4]
    $region17: #{tpu_custom_call.1} parent=1 // pred_fallthru
      _
    // Predicated region
    $region18: #{tpu_custom_call.1} parent=1 // pred_check
      _
    $region19: #{tpu_custom_call.1} parent=1 // pred_check_branch
      %68 = sbr.rel (0) target = $region21
    $region20: #{tpu_custom_call.1} parent=1 // pred_region
      %69 = dma.done [#allocation4], 128
    $region21: #{tpu_custom_call.1} parent=1 // pred_fallthru
      _
    %70 = vsyncpa [#allocation4], 1

</llo_original>
